<compile_context>
chip_gen: v5e
topology: v5e:2x2
jax: 0.10.0
libtpu: 0.0.40
codegen_flags: <defaults>
</compile_context>

<pallas_src>
import functools

import jax
import jax.numpy as jnp
import numpy as np
from jax import lax
from jax.experimental import pallas as pl
from jax.experimental.pallas import tpu as pltpu


def _rbf_tile_kernel(coeffs_ref, ni_ref, nj_ref, xi_ref, xj_ref, out_ref,
                     *, n_kernels, use_pow2):
    # xi_ref: (TI, D) rows i of X;  xj_ref: (TJ, D) rows j of X.
    xi = xi_ref[...]
    xj = xj_ref[...]

    # Gram term on the MXU, contracting the feature dim of both operands
    # (trans-B contraction -> no explicit transpose of the (TJ, D) tile).
    gram = lax.dot_general(
        xi, xj,
        dimension_numbers=(((1,), (1,)), ((), ())),
        preferred_element_type=jnp.float32,
    )  # (TI, TJ)

    # Pairwise squared distances for this tile (row norms precomputed).
    d2 = ni_ref[...] + nj_ref[...] - 2.0 * gram
    d2 = jnp.maximum(d2, 0.0)  # guard tiny negatives (matches cdist clamp)

    mid = n_kernels // 2
    if use_pow2:
        # mul_factor == 2: coeff_k = coeff_mid * 2^(mid-k), coeff_mid = -1/bw.
        #   k = mid            -> e = exp(coeff_mid * d2)
        #   k < mid (mult<1)   -> e^2, e^4, ...   (VPU squarings)
        #   k > mid (mult>1)   -> sqrt(e), sqrt(sqrt(e)), ... (EUP sqrt)
        e = jnp.exp(d2 * coeffs_ref[mid])
        acc = e
        p = e
        for _ in range(mid):                      # squaring chain
            p = p * p
            acc = acc + p
        s = e
        for _ in range(n_kernels - 1 - mid):      # sqrt chain
            s = jnp.sqrt(s)
            acc = acc + s
    else:
        acc = jnp.zeros_like(d2)
        for k in range(n_kernels):                # static unroll, K is small
            acc = acc + jnp.exp(d2 * coeffs_ref[k])

    out_ref[...] = acc


def rbf_forward(X, n_kernels=5, mul_factor=2.0, bandwidth=None):
    """Equivalent of RBF.forward(X).  X: [N, D] float.  Returns [N, N] float32."""
    # Keep bf16 inputs in bf16 on the MXU path (f32 accumulation); everything
    # else is upcast to f32.  Norms / bandwidth always computed in f32.
    if X.dtype == jnp.bfloat16:
        x_in = X
    else:
        x_in = X.astype(jnp.float32)
    Xf = X.astype(jnp.float32)
    N, D = Xf.shape

    # Bandwidth multipliers (static) and the data-dependent bandwidth scalar.
    mults = (float(mul_factor)
             ** (jnp.arange(n_kernels, dtype=jnp.float32) - n_kernels // 2))
    if bandwidth is None:
        # Stable centered form:
        #   sum_ij ||x_i - x_j||^2 == 2 * N * sum_i ||x_i - mean(x)||^2
        mean = jnp.mean(Xf, axis=0, keepdims=True)
        Xc = Xf - mean
        total_d2 = 2.0 * N * jnp.sum(Xc * Xc)
        denom = jnp.float32(max(N * N - N, 1))    # guard N == 1
        bw = total_d2 / denom
    else:
        bw = jnp.float32(bandwidth)
    coeffs = (-1.0 / (bw * mults)).astype(jnp.float32)               # [K]

    # Row norms ||x_i||^2 computed once, streamed as (Np,1) and (1,Np) blocks.
    norms = jnp.sum(Xf * Xf, axis=-1).astype(jnp.float32)            # [N]

    # Tile selection: 512x512 lane-dense output tiles for large N; a single
    # full-extent block for small N (full-extent dims bypass the (8,128) rule).
    if N <= 512:
        TI = TJ = N
        Np = N
        Xp, normsp = x_in, norms
    else:
        TI = TJ = 512
        Np = -(-N // TI) * TI
        pad = Np - N
        Xp = jnp.pad(x_in, ((0, pad), (0, 0))) if pad else x_in
        normsp = jnp.pad(norms, (0, pad)) if pad else norms

    ni = normsp.reshape(Np, 1)
    nj = normsp.reshape(1, Np)

    use_pow2 = (float(mul_factor) == 2.0) and n_kernels >= 1
    kernel = functools.partial(_rbf_tile_kernel, n_kernels=n_kernels,
                               use_pow2=use_pow2)

    n_eup = (1 + (n_kernels - 1 - n_kernels // 2)) if use_pow2 else n_kernels
    cost = pl.CostEstimate(
        flops=int(2 * Np * Np * D + 8 * Np * Np),
        transcendentals=int(n_eup * Np * Np),
        bytes_accessed=int(4 * Np * Np + 2 * Np * D * Xp.dtype.itemsize
                           + 8 * Np + 4 * n_kernels),
    )

    out = pl.pallas_call(
        kernel,
        out_shape=jax.ShapeDtypeStruct((Np, Np), jnp.float32),
        grid=(Np // TI, Np // TJ),
        in_specs=[
            # K per-kernel coefficients -> SMEM (scalar reads in the kernel).
            pl.BlockSpec(memory_space=pltpu.MemorySpace.SMEM),
            # Precomputed row norms for the i side / j side.
            pl.BlockSpec((TI, 1), lambda i, j: (i, 0)),
            pl.BlockSpec((1, TJ), lambda i, j: (0, j)),
            # Row tile of X (i side) and column tile of X (j side).
            pl.BlockSpec((TI, D), lambda i, j: (i, 0)),
            pl.BlockSpec((TJ, D), lambda i, j: (j, 0)),
        ],
        out_specs=pl.BlockSpec((TI, TJ), lambda i, j: (i, j)),
        compiler_params=pltpu.CompilerParams(
            dimension_semantics=("parallel", "parallel"),
        ),
        cost_estimate=cost,
    )(coeffs, ni, nj, Xp, Xp)

    if Np != N:
        out = out[:N, :N]
    return out


if __name__ == "__main__":
    n_kernels = 5
    mul_factor = 2.0
    N, D = 16, 32

    key = jax.random.PRNGKey(0)
    X = jax.random.normal(key, (N, D), dtype=jnp.float32)

    out = rbf_forward(X, n_kernels=n_kernels, mul_factor=mul_factor, bandwidth=None)
    out = jax.block_until_ready(out)

    # Pure-JAX reference mirroring the PyTorch module.
    d2_ref = jnp.sum((X[:, None, :] - X[None, :, :]) ** 2, axis=-1)
    bw_ref = jnp.sum(d2_ref) / (N * N - N)
    mults = (mul_factor ** (jnp.arange(n_kernels, dtype=jnp.float32)
                            - n_kernels // 2))
    ref = jnp.sum(
        jnp.exp(-d2_ref[None, ...] / (bw_ref * mults)[:, None, None]), axis=0
    )

    assert out.shape == (N, N)
    assert np.allclose(np.asarray(out), np.asarray(ref), rtol=1e-4, atol=1e-4), (
        np.max(np.abs(np.asarray(out) - np.asarray(ref)))
    )

    print("KERNEL_OK")
</pallas_src>

<mosaic_0001>
module attributes {stable_mosaic.version = 11 : i64} {
  func.func @_rbf_tile_kernel(%arg0: i32, %arg1: i32, %arg2: memref<5xf32, #tpu.memory_space<smem>>, %arg3: memref<16x1xf32, #tpu.memory_space<vmem>>, %arg4: memref<1x16xf32, #tpu.memory_space<vmem>>, %arg5: memref<16x32xf32, #tpu.memory_space<vmem>>, %arg6: memref<16x32xf32, #tpu.memory_space<vmem>>, %arg7: memref<16x16xf32, #tpu.memory_space<vmem>>) attributes {dimension_semantics = [#tpu.dimension_semantics<parallel>, #tpu.dimension_semantics<parallel>], iteration_bounds = array<i64: 1, 1>, scalar_prefetch = 0 : i64, scratch_operands = 0 : i64, tpu.core_type = #tpu.core_type<tc>, window_params = [{transform_indices = @transform_0, window_bounds = array<i64: 5>}, {transform_indices = @transform_1, window_bounds = array<i64: 16, 1>}, {transform_indices = @transform_2, window_bounds = array<i64: 1, 16>}, {transform_indices = @transform_3, window_bounds = array<i64: 16, 32>}, {transform_indices = @transform_4, window_bounds = array<i64: 16, 32>}, {transform_indices = @transform_5, window_bounds = array<i64: 16, 16>}]} {
    %c0 = arith.constant 0 : index
    %c0_0 = arith.constant 0 : index
    %0 = vector.load %arg5[%c0, %c0_0] : memref<16x32xf32, #tpu.memory_space<vmem>>, vector<16x32xf32>
    %c0_1 = arith.constant 0 : index
    %c0_2 = arith.constant 0 : index
    %1 = vector.load %arg6[%c0_1, %c0_2] : memref<16x32xf32, #tpu.memory_space<vmem>>, vector<16x32xf32>
    %cst = arith.constant dense<0.000000e+00> : vector<16x16xf32>
    %2 = tpu.matmul %0, %1, %cst {dimension_numbers = #tpu.dot_dimension_numbers<[1], [1], [0], [0], [0, 0, 1, 0], [], []>} : vector<16x32xf32>, vector<16x32xf32>, vector<16x16xf32> -> vector<16x16xf32>
    %c0_3 = arith.constant 0 : index
    %c0_4 = arith.constant 0 : index
    %3 = vector.load %arg3[%c0_3, %c0_4] : memref<16x1xf32, #tpu.memory_space<vmem>>, vector<16x1xf32>
    %c0_5 = arith.constant 0 : index
    %c0_6 = arith.constant 0 : index
    %4 = vector.load %arg4[%c0_5, %c0_6] : memref<1x16xf32, #tpu.memory_space<vmem>>, vector<1x16xf32>
    %5 = vector.broadcast %3 : vector<16x1xf32> to vector<16x16xf32>
    %6 = vector.broadcast %4 : vector<1x16xf32> to vector<16x16xf32>
    %7 = arith.addf %5, %6 : vector<16x16xf32>
    %cst_7 = arith.constant 2.000000e+00 : f32
    %8 = vector.broadcast %cst_7 : f32 to vector<16x16xf32>
    %9 = arith.mulf %8, %2 : vector<16x16xf32>
    %10 = arith.subf %7, %9 : vector<16x16xf32>
    %cst_8 = arith.constant 0.000000e+00 : f32
    %11 = vector.broadcast %cst_8 : f32 to vector<16x16xf32>
    %12 = arith.maximumf %10, %11 : vector<16x16xf32>
    %c2 = arith.constant 2 : index
    %13 = memref.load %arg2[%c2] : memref<5xf32, #tpu.memory_space<smem>>
    %14 = vector.broadcast %13 : f32 to vector<16x16xf32>
    %15 = arith.mulf %12, %14 : vector<16x16xf32>
    %16 = math.exp %15 : vector<16x16xf32>
    %17 = arith.mulf %16, %16 : vector<16x16xf32>
    %18 = arith.addf %16, %17 : vector<16x16xf32>
    %19 = arith.mulf %17, %17 : vector<16x16xf32>
    %20 = arith.addf %18, %19 : vector<16x16xf32>
    %21 = math.sqrt %16 : vector<16x16xf32>
    %22 = arith.addf %20, %21 : vector<16x16xf32>
    %23 = math.sqrt %21 : vector<16x16xf32>
    %24 = arith.addf %22, %23 : vector<16x16xf32>
    %c0_9 = arith.constant 0 : index
    %c0_10 = arith.constant 0 : index
    %25 = vector.load %arg7[%c0_9, %c0_10] : memref<16x16xf32, #tpu.memory_space<vmem>>, vector<16x16xf32>
    tpu.vector_store %arg7[%c0_9, %c0_10], %24 {strides = array<i32>} : memref<16x16xf32, #tpu.memory_space<vmem>>, vector<16x16xf32>,
    return
  }
  func.func @transform_0(%arg0: i32, %arg1: i32) -> i32 {
    %c0_i32 = arith.constant 0 : i32
    %c0_i32_0 = arith.constant 0 : i32
    return %c0_i32 : i32
  }
  func.func @transform_1(%arg0: i32, %arg1: i32) -> (i32, i32) {
    %c0_i32 = arith.constant 0 : i32
    %c0_i32_0 = arith.constant 0 : i32
    return %arg0, %c0_i32 : i32, i32
  }
  func.func @transform_2(%arg0: i32, %arg1: i32) -> (i32, i32) {
    %c0_i32 = arith.constant 0 : i32
    %c0_i32_0 = arith.constant 0 : i32
    return %c0_i32, %arg1 : i32, i32
  }
  func.func @transform_3(%arg0: i32, %arg1: i32) -> (i32, i32) {
    %c0_i32 = arith.constant 0 : i32
    %c0_i32_0 = arith.constant 0 : i32
    return %arg0, %c0_i32 : i32, i32
  }
  func.func @transform_4(%arg0: i32, %arg1: i32) -> (i32, i32) {
    %c0_i32 = arith.constant 0 : i32
    %c0_i32_0 = arith.constant 0 : i32
    return %arg1, %c0_i32 : i32, i32
  }
  func.func @transform_5(%arg0: i32, %arg1: i32) -> (i32, i32) {
    %c0_i32 = arith.constant 0 : i32
    return %arg0, %arg1 : i32, i32
  }
}

</mosaic_0001>

<llo_original>
// kernel: tpu_custom_call.1
$region0: #{tpu_custom_call.1}
  #allocation0 [shape = 'u32[]', space=smem, size = 0x4, offset = 0x4, fixed_abs, tag = 'smem constant byte address 0x4 - core index']
  #allocation1 [shape = 'u32[72,128]{1,0:T(1,128)}', space=vmem, size = 0x9000, scoped, tag = 'internal scratch']
  %s0 = inlined_call_operand.vmem [shape: f32[5], index: 0, kind: input, shape index: {}]
  %s1 = inlined_call_operand.vmem [shape: f32[16,1], index: 1, kind: input, shape index: {}]
  %s2 = inlined_call_operand.vmem [shape: f32[1,16], index: 2, kind: input, shape index: {}]
  %s3 = inlined_call_operand.vmem [shape: f32[16,32], index: 3, kind: input, shape index: {}]
  %s4 = inlined_call_operand.hbm [shape: f32[16,32], index: 4, kind: input, shape index: {}]
  %s5 = inlined_call_operand.hbm [shape: f32[16,16], index: 5, kind: output, shape index: {}]
  %s6 = sld [smem:[#allocation0]]
  $region38: #{tpu_custom_call.1} parent=0
    _
  %s8 = ssub.s32 1, %s6
  %s9 = scalar_select 0, %s8, %s6
  $region1: #{tpu_custom_call.1} parent=0
    #allocation2 [shape = 'u8[512]{0}', space=smem, size = 0x200, scoped, tag = 'input window, operand 0, single buffered']
    #allocation3 [shape = 's32[1]{0}', space=sflag, size = 0x4, scoped, tag = 'scoped memory for tpu_custom_call.1']
    #allocation4 [shape = 's32[1]{0}', space=sflag, size = 0x4, scoped, tag = 'scoped memory for tpu_custom_call.1']
    #allocation5 [shape = 's32[1]{0}', space=sflag, size = 0x4, scoped, tag = 'scoped memory for tpu_custom_call.1']
    #allocation6 [shape = 'u8[8192]{0}', space=vmem, size = 0x2000, scoped, tag = 'input window, operand 4, single buffered']
    #allocation7 [shape = 'u8[8192]{0}', space=vmem, size = 0x2000, scoped, tag = 'output window, operand 0, single buffered']
    %10 = vsyncpa [#allocation5], 0
    %11 = vsyncpa [#allocation3], 0
    %12 = vsyncpa [#allocation4], 0
    // Predicated region
    $region2: #{tpu_custom_call.1} parent=1 // pred_check
      _
    $region3: #{tpu_custom_call.1} parent=1 // pred_check_branch
      %14 = sbr.rel (0) target = $region5
    $region4: #{tpu_custom_call.1} parent=1 // pred_region
      %16 = vsyncadd [#allocation5], 0
      %s18 = sshll.u32 %s0, 4
      %s19 = int_to_ptr.vmem [resolvable:$true] %s18
      %21 = dma.vmem_to_smem %s19, 16, [#allocation2], [#allocation5]
    $region5: #{tpu_custom_call.1} parent=1 // pred_fallthru
      _
    // Predicated region
    $region6: #{tpu_custom_call.1} parent=1 // pred_check
      _
    $region7: #{tpu_custom_call.1} parent=1 // pred_check_branch
      %23 = sbr.rel (0) target = $region9
    $region8: #{tpu_custom_call.1} parent=1 // pred_region
      _
    $region9: #{tpu_custom_call.1} parent=1 // pred_fallthru
      _
    // Predicated region
    $region10: #{tpu_custom_call.1} parent=1 // pred_check
      _
    $region11: #{tpu_custom_call.1} parent=1 // pred_check_branch
      %25 = sbr.rel (0) target = $region13
    $region12: #{tpu_custom_call.1} parent=1 // pred_region
      _
    $region13: #{tpu_custom_call.1} parent=1 // pred_fallthru
      _
    // Predicated region
    $region14: #{tpu_custom_call.1} parent=1 // pred_check
      _
    $region15: #{tpu_custom_call.1} parent=1 // pred_check_branch
      %27 = sbr.rel (0) target = $region17
    $region16: #{tpu_custom_call.1} parent=1 // pred_region
      _
    $region17: #{tpu_custom_call.1} parent=1 // pred_fallthru
      _
    // Predicated region
    $region18: #{tpu_custom_call.1} parent=1 // pred_check
      _
    $region19: #{tpu_custom_call.1} parent=1 // pred_check_branch
      %29 = sbr.rel (0) target = $region21
    $region20: #{tpu_custom_call.1} parent=1 // pred_region
      %31 = vsyncadd [#allocation3], 0
      %s32 = sshll.u32 %s4, 4
      %s33 = int_to_ptr.hbm [resolvable:$true] %s32
      %s34 = sshll.u32 [#allocation6], 4
      %s35 = int_to_ptr.vmem [resolvable:$true] %s34
      %40 = dma.hbm_to_vmem [thread:$0]  %s33, 256, %s35, [#allocation3], 128, 128, 8
    $region21: #{tpu_custom_call.1} parent=1 // pred_fallthru
      _
    // Predicated region
    $region22: #{tpu_custom_call.1} parent=1 // pred_check
      _
    $region23: #{tpu_custom_call.1} parent=1 // pred_check_branch
      %42 = sbr.rel (0) target = $region25
    $region24: #{tpu_custom_call.1} parent=1 // pred_region
      %44 = dma.done [#allocation5], 16
    $region25: #{tpu_custom_call.1} parent=1 // pred_fallthru
      _
    // Predicated region
    $region26: #{tpu_custom_call.1} parent=1 // pred_check
      _
    $region27: #{tpu_custom_call.1} parent=1 // pred_check_branch
      %46 = sbr.rel (0) target = $region29
    $region28: #{tpu_custom_call.1} parent=1 // pred_region
      %48 = dma.done [#allocation3], 256
    $region29: #{tpu_custom_call.1} parent=1 // pred_fallthru
      _
    %49 = sfence
    %v50 = vld [vmem:[%s3] sm:$0xff]
    %v51 = vld [vmem:[%s3 + $0x8] sm:$0xff]
    %v52 = vld [vmem:[#allocation6] sm:$0xff]
    %v53 = vld [vmem:[#allocation6 + $0x8] sm:$0xff]
    %vm54 = vcmask 261120
    %v56 = vsel %vm54, %v50, 0
    %v59 = vsel %vm54, %v51, 0
    %v62 = vsel %vm54, %v52, 0
    %v65 = vsel %vm54, %v53, 0
    %67 = vmatpush.xpose.msra.mxu0 0.0
    %68 = vmatpush.xpose.msra.mxu0 0.0
    %69 = vmatpush.xpose.msra.mxu0 0.0
    %70 = vmatpush.xpose.msra.mxu0 0.0
    %71 = vmatpush.xpose.msra.mxu0 0.0
    %72 = vmatpush.xpose.msra.mxu0 0.0
    %73 = vmatpush.xpose.msra.mxu0 0.0
    %74 = vmatpush.xpose.msra.mxu0 0.0
    %75 = vmatpush.xpose.msra.mxu0 0.0
    %76 = vmatpush.xpose.msra.mxu0 0.0
    %77 = vmatpush.xpose.msra.mxu0 0.0
    %78 = vmatpush.xpose.msra.mxu0 0.0
    %79 = vmatpush.xpose.msra.mxu0 0.0
    %80 = vmatpush.xpose.msra.mxu0 0.0
    %81 = vmatpush.xpose.msra.mxu0 %v65
    %82 = vmatpush.xpose.msra.mxu0 %v62
    %83 = vmatmul.f32.gmra.mxu0 %v56
    %v84 = vpop.f32.mrf.mxu0
    %v85 = vadd.f32 0.0, %v84
    %86 = vmatmul.f32.gmra.mxu0 %v59
    %v87 = vpop.f32.mrf.mxu0
    %v88 = vadd.f32 0.0, %v87
    %89 = vdwg.mxu0
    %v90 = vld [vmem:[%s1] sm:$0xff]
    %v91 = vld [vmem:[%s1 + $0x8] sm:$0xff]
    %v92 = vld [vmem:[%s2] sm:$0x1]
    %94 = vset.pattern.permute.xlu0 0
    %95 = vperm.xlu0 %94, %v90
    %v96 = vpop.permute.xlu0 %95
    %99 = vset.pattern.permute.xlu0 0
    %100 = vperm.xlu0 %99, %v91
    %v101 = vpop.permute.xlu0 %100
    %v104 = vperm.slane %v92, 0
    %v106 = vadd.f32 %v96, %v104
    %v107 = vadd.f32 %v101, %v104
    %v108 = vmul.f32 %v85, 2.0
    %v109 = vmul.f32 %v88, 2.0
    %v110 = vsub.f32 %v106, %v108
    %v111 = vsub.f32 %v107, %v109
    %v112 = vmax.f32 %v110, 0.0
    %v113 = vmax.f32 %v111, 0.0
    %s114 = sld [smem:[#allocation2 + $0x2]]
    %v115 = vstv %s114
    %v116 = vmul.f32 %v112, %v115
    %v117 = vmul.f32 %v113, %v115
    %v118 = vmul.f32 %v116, 1.442695
    %v119 = vpow.pop %v118
    %v120 = vmul.f32 %v117, 1.442695
    %v121 = vpow.pop %v120
    %v122 = vmul.f32 %v119, %v119
    %v123 = vmul.f32 %v121, %v121
    %v124 = vadd.f32 %v119, %v122
    %v125 = vadd.f32 %v121, %v123
    %v126 = vmul.f32 %v122, %v122
    %v127 = vmul.f32 %v123, %v123
    %v128 = vadd.f32 %v124, %v126
    %v129 = vadd.f32 %v125, %v127
    %v130 = vrsqrt.pop %v119
    %v131 = vmul.f32 %v130, %v119
    %v132 = vmul.f32 %v131, %v130
    %v133 = vmul.f32 0.5, %v132
    %v134 = vsub.f32 1.5, %v133
    %v135 = vmul.f32 %v130, %v134
    %v136 = vmul.f32 %v119, %v135
    %vm137 = vcmp.eq.f32.partialorder %v119, inf
    %v138 = vsel %vm137, %v119, %v136
    %vm139 = vcmp.eq.f32.partialorder %v119, 0.0
    %v140 = vand.u32 %v119, 2147483648
    %v141 = vsel %vm139, %v140, %v138
    %v142 = vrsqrt.pop %v121
    %v143 = vmul.f32 %v142, %v121
    %v144 = vmul.f32 %v143, %v142
    %v145 = vmul.f32 0.5, %v144
    %v146 = vsub.f32 1.5, %v145
    %v147 = vmul.f32 %v142, %v146
    %v148 = vmul.f32 %v121, %v147
    %vm149 = vcmp.eq.f32.partialorder %v121, inf
    %v150 = vsel %vm149, %v121, %v148
    %vm151 = vcmp.eq.f32.partialorder %v121, 0.0
    %v152 = vand.u32 %v121, 2147483648
    %v153 = vsel %vm151, %v152, %v150
    %v154 = vadd.f32 %v128, %v141
    %v155 = vadd.f32 %v129, %v153
    %v156 = vrsqrt.pop %v141
    %v157 = vmul.f32 %v156, %v141
    %v158 = vmul.f32 %v157, %v156
    %v159 = vmul.f32 0.5, %v158
    %v160 = vsub.f32 1.5, %v159
    %v161 = vmul.f32 %v156, %v160
    %v162 = vmul.f32 %v141, %v161
    %vm163 = vcmp.eq.f32.partialorder %v141, inf
    %v164 = vsel %vm163, %v141, %v162
    %vm165 = vcmp.eq.f32.partialorder %v141, 0.0
    %v166 = vand.u32 %v141, 2147483648
    %v167 = vsel %vm165, %v166, %v164
    %v168 = vrsqrt.pop %v153
    %v169 = vmul.f32 %v168, %v153
    %v170 = vmul.f32 %v169, %v168
    %v171 = vmul.f32 0.5, %v170
    %v172 = vsub.f32 1.5, %v171
    %v173 = vmul.f32 %v168, %v172
    %v174 = vmul.f32 %v153, %v173
    %vm175 = vcmp.eq.f32.partialorder %v153, inf
    %v176 = vsel %vm175, %v153, %v174
    %vm177 = vcmp.eq.f32.partialorder %v153, 0.0
    %v178 = vand.u32 %v153, 2147483648
    %v179 = vsel %vm177, %v178, %v176
    %v180 = vadd.f32 %v154, %v167
    %v181 = vadd.f32 %v155, %v179
    %vm182 = vcmask 130048
    %183 = vst.msk [vmem:[#allocation7] sm:$0xff] %vm182, %v180
    %184 = vst.msk [vmem:[#allocation7 + $0x8] sm:$0xff] %vm182, %v181
    // Predicated region
    $region30: #{tpu_custom_call.1} parent=1 // pred_check
      _
    $region31: #{tpu_custom_call.1} parent=1 // pred_check_branch
      %186 = sbr.rel (0) target = $region33
    $region32: #{tpu_custom_call.1} parent=1 // pred_region
      %188 = vsyncadd [#allocation4], 0
      %s189 = sshll.u32 [#allocation7], 4
      %s190 = int_to_ptr.vmem [resolvable:$true] %s189
      %s191 = sshll.u32 %s5, 4
      %s192 = int_to_ptr.hbm [resolvable:$true] %s191
      %197 = dma.vmem_to_hbm [thread:$0]  %s190, 256, %s192, [#allocation4], 128, 128, 8
    $region33: #{tpu_custom_call.1} parent=1 // pred_fallthru
      _
    // Predicated region
    $region34: #{tpu_custom_call.1} parent=1 // pred_check
      _
    $region35: #{tpu_custom_call.1} parent=1 // pred_check_branch
      %199 = sbr.rel (0) target = $region37
    $region36: #{tpu_custom_call.1} parent=1 // pred_region
      %201 = dma.done [#allocation4], 256
    $region37: #{tpu_custom_call.1} parent=1 // pred_fallthru
      _
    %202 = vsyncpa [#allocation3], 1
    %203 = vsyncpa [#allocation4], 1
    %204 = vsyncpa [#allocation5], 1

</llo_original>
